<compile_context>
chip_gen: v6e
topology: v6e:2x2x1
jax: 0.10.0
libtpu: 0.0.40
codegen_flags: <defaults>
</compile_context>

<pallas_src>
import jax
import jax.numpy as jnp
from jax.experimental import pallas as pl
from jax.experimental.pallas import tpu as pltpu


def _conv1x1_kernel(x_ref, w_ref, b_ref, o_ref):
    """One (batch, spatial-tile) block of a 1x1 conv: o = W @ x + b.

    x_ref: (1, Cp, T)   w_ref: (Cp, Cp)   b_ref: (Cp, 1) f32   o_ref: (1, Cp, T)
    """
    y = jnp.dot(w_ref[...], x_ref[0], preferred_element_type=jnp.float32)
    o_ref[0] = (y + b_ref[...]).astype(o_ref.dtype)


def _enhance_matrix(C, n_div):
    """f32 S such that (S @ x_channels) == enhance(x) along the channel axis."""
    fold = C // n_div
    lim = fold if n_div == 2 else 2 * fold
    eye = jnp.eye(C, dtype=jnp.float32)
    shift = jnp.eye(C, k=fold, dtype=jnp.float32) * (jnp.arange(C)[:, None] < lim)
    return eye + shift


def _round_up(v, m):
    return -(-v // m) * m


def channel_enhance_1(x, w, b, *, n_div=8):
    """ChannelEnhance_1 forward.  x: (B, C, H, W); net = 1x1 Conv2d(C, C) with
    weight w: (C, C) and bias b: (C,)."""
    B, C, H, W = x.shape
    assert C % n_div == 0, "enhance()!!!"
    HW = H * W
    dtype = x.dtype
    itemsize = jnp.dtype(dtype).itemsize

    # ---- fold the channel shift-enhance into the conv weight (f32, once) ----
    S = _enhance_matrix(C, n_div)                        # (C, C) f32
    w_eff = jnp.dot(w.astype(jnp.float32), S)            # net(enhance(x)) == w_eff @ x

    # ---- sublane packing: merge batch pairs along channels when C rows
    #      under-fill a packed vreg (e.g. C=8 bf16 would pad 8 -> 16 rows).
    sublane_rows = max(8, 32 // itemsize)                # 8 f32 / 16 bf16 / 32 int8
    pack = 1
    while C * pack < sublane_rows and B % (2 * pack) == 0:
        pack *= 2
    Bp, Cp = B // pack, C * pack
    if pack > 1:
        w_eff = jnp.kron(jnp.eye(pack, dtype=jnp.float32), w_eff)   # block-diag
    w_eff = w_eff.astype(dtype)                          # (Cp, Cp) storage dtype
    b_col = jnp.tile(b.astype(jnp.float32), pack).reshape(Cp, 1)    # f32 bias

    x_flat = x.reshape(Bp, Cp, HW)

    # ---- tile selection ------------------------------------------------------
    # VMEM bytes per lane-column: double-buffered in + out (storage dtype)
    # plus the f32 accumulation intermediate.
    per_col = Cp * (4 * itemsize + 4)
    vmem_budget = 12 * 1024 * 1024       # conservative: fits v5e's 16 MiB scoped default
    hw128 = _round_up(HW, 128)
    t_hw = min(hw128, max(128, (vmem_budget // per_col) // 128 * 128))
    # Target >= 8 grid steps (>= 4 per TC on v7x) when the problem is big
    # enough, but keep each I/O tile >= ~512 KiB so step overhead amortizes.
    min_tile_bytes = 512 * 1024
    while (Bp * pl.cdiv(hw128, t_hw) < 8 and t_hw > 128
           and Cp * (t_hw // 2) * itemsize >= min_tile_bytes):
        t_hw = max(128, _round_up(t_hw // 2, 128))
    hw_pad = _round_up(HW, t_hw)         # full blocks only -> unmasked lane-dense vst
    if hw_pad != HW:
        x_flat = jnp.pad(x_flat, ((0, 0), (0, 0), (0, hw_pad - HW)))
    grid = (Bp, hw_pad // t_hw)
    # --------------------------------------------------------------------------

    cost = pl.CostEstimate(
        flops=2 * Bp * Cp * Cp * hw_pad,
        transcendentals=0,
        bytes_accessed=(2 * Bp * Cp * hw_pad * itemsize
                        + Cp * Cp * itemsize + Cp * 4),
    )

    out = pl.pallas_call(
        _conv1x1_kernel,
        out_shape=jax.ShapeDtypeStruct((Bp, Cp, hw_pad), dtype),
        grid_spec=pltpu.PrefetchScalarGridSpec(
            num_scalar_prefetch=0,
            grid=grid,
            in_specs=[
                pl.BlockSpec((1, Cp, t_hw), lambda bi, si: (bi, 0, si)),
                pl.BlockSpec((Cp, Cp), lambda bi, si: (0, 0)),
                pl.BlockSpec((Cp, 1), lambda bi, si: (0, 0)),
            ],
            out_specs=pl.BlockSpec((1, Cp, t_hw), lambda bi, si: (bi, 0, si)),
        ),
        compiler_params=pltpu.CompilerParams(
            dimension_semantics=("parallel", "parallel")),
        cost_estimate=cost,
    )(x_flat, w_eff, b_col)

    return out[:, :, :HW].reshape(B, C, H, W)


def _reference(x, w, b, *, n_div=8):
    """Unfused JAX reference: enhance() followed by a 1x1 conv."""
    B, C, H, W = x.shape
    fold = C // n_div
    out = jnp.zeros_like(x)
    out = out.at[:, :fold].set(x[:, :fold] + x[:, fold:2 * fold])
    if n_div == 2:
        out = out.at[:, fold:2 * fold].set(x[:, fold:2 * fold])
    else:
        out = out.at[:, fold:2 * fold].set(
            x[:, fold:2 * fold] + x[:, 2 * fold:3 * fold])
        out = out.at[:, 2 * fold:].set(x[:, 2 * fold:])
    return jnp.einsum("oc,bchw->bohw", w, out) + b[None, :, None, None]


if __name__ == "__main__":
    key = jax.random.PRNGKey(0)
    kx, kw, kb = jax.random.split(key, 3)

    # --- case 1: base f32, B=2, C=8, 16x16, n_div=8 ---------------------------
    B, C, H, W = 2, 8, 16, 16
    x = jax.random.normal(kx, (B, C, H, W), dtype=jnp.float32)
    w = jax.random.normal(kw, (C, C), dtype=jnp.float32) * 0.1
    b = jax.random.normal(kb, (C,), dtype=jnp.float32) * 0.1

    ref = _reference(x, w, b, n_div=8)
    out = jax.block_until_ready(channel_enhance_1(x, w, b, n_div=8))
    assert out.shape == ref.shape == (B, C, H, W)
    assert jnp.allclose(out, ref, atol=1e-4, rtol=1e-4), "mismatch (f32)"

    # --- case 2: bf16 storage (small C -> batch-pair sublane packing) ---------
    out_bf = jax.block_until_ready(channel_enhance_1(
        x.astype(jnp.bfloat16), w.astype(jnp.bfloat16), b.astype(jnp.bfloat16),
        n_div=8))
    assert jnp.allclose(out_bf.astype(jnp.float32), ref,
                        atol=1e-1, rtol=1e-1), "mismatch (bf16)"

    # --- case 3: odd spatial size (7x7 -> HW padded to 128), n_div=2 ----------
    x3 = jax.random.normal(kx, (2, 8, 7, 7), dtype=jnp.float32)
    ref3 = _reference(x3, w, b, n_div=2)
    out3 = jax.block_until_ready(channel_enhance_1(x3, w, b, n_div=2))
    assert jnp.allclose(out3, ref3, atol=1e-4, rtol=1e-4), "mismatch (7x7, n_div=2)"

    # --- case 4: C=16, n_div=4, non-128-multiple HW (12x12 = 144) -------------
    C4 = 16
    x4 = jax.random.normal(kx, (3, C4, 12, 12), dtype=jnp.float32)
    w4 = jax.random.normal(kw, (C4, C4), dtype=jnp.float32) * 0.1
    b4 = jax.random.normal(kb, (C4,), dtype=jnp.float32) * 0.1
    ref4 = _reference(x4, w4, b4, n_div=4)
    out4 = jax.block_until_ready(channel_enhance_1(x4, w4, b4, n_div=4))
    assert jnp.allclose(out4, ref4, atol=1e-4, rtol=1e-4), "mismatch (C=16, n_div=4)"

    print("KERNEL_OK")
</pallas_src>

<mosaic_0001>
module attributes {stable_mosaic.version = 11 : i64} {
  func.func @_conv1x1_kernel(%arg0: i32, %arg1: i32, %arg2: memref<1x8x256xf32, #tpu.memory_space<vmem>>, %arg3: memref<8x8xf32, #tpu.memory_space<vmem>>, %arg4: memref<8x1xf32, #tpu.memory_space<vmem>>, %arg5: memref<1x8x256xf32, #tpu.memory_space<vmem>>) attributes {dimension_semantics = [#tpu.dimension_semantics<parallel>, #tpu.dimension_semantics<parallel>], iteration_bounds = array<i64: 2, 1>, scalar_prefetch = 0 : i64, scratch_operands = 0 : i64, tpu.core_type = #tpu.core_type<tc>, window_params = [{transform_indices = @transform_0, window_bounds = array<i64: 1, 8, 256>}, {pipeline_mode = #tpu.pipeline_mode<synchronous>, transform_indices = @transform_1, window_bounds = array<i64: 8, 8>}, {pipeline_mode = #tpu.pipeline_mode<synchronous>, transform_indices = @transform_2, window_bounds = array<i64: 8, 1>}, {transform_indices = @transform_3, window_bounds = array<i64: 1, 8, 256>}]} {
    %c0 = arith.constant 0 : index
    %c0_0 = arith.constant 0 : index
    %0 = vector.load %arg3[%c0, %c0_0] : memref<8x8xf32, #tpu.memory_space<vmem>>, vector<8x8xf32>
    %c0_1 = arith.constant 0 : index
    %c0_2 = arith.constant 0 : index
    %c0_3 = arith.constant 0 : index
    %1 = vector.load %arg2[%c0_1, %c0_2, %c0_3] : memref<1x8x256xf32, #tpu.memory_space<vmem>>, vector<1x8x256xf32>
    %2 = vector.shape_cast %1 : vector<1x8x256xf32> to vector<8x256xf32>
    %cst = arith.constant dense<0.000000e+00> : vector<8x256xf32>
    %3 = tpu.matmul %0, %2, %cst {dimension_numbers = #tpu.dot_dimension_numbers<[1], [0], [0], [1], [0, 0, 1, 1], [], []>} : vector<8x8xf32>, vector<8x256xf32>, vector<8x256xf32> -> vector<8x256xf32>
    %c0_4 = arith.constant 0 : index
    %c0_5 = arith.constant 0 : index
    %4 = vector.load %arg4[%c0_4, %c0_5] : memref<8x1xf32, #tpu.memory_space<vmem>>, vector<8x1xf32>
    %5 = vector.broadcast %4 : vector<8x1xf32> to vector<8x256xf32>
    %6 = arith.addf %3, %5 : vector<8x256xf32>
    %c0_6 = arith.constant 0 : index
    %c0_7 = arith.constant 0 : index
    %c0_8 = arith.constant 0 : index
    %7 = vector.load %arg5[%c0_6, %c0_7, %c0_8] : memref<1x8x256xf32, #tpu.memory_space<vmem>>, vector<1x8x256xf32>
    %8 = vector.shape_cast %7 : vector<1x8x256xf32> to vector<8x256xf32>
    %9 = vector.shape_cast %6 : vector<8x256xf32> to vector<1x8x256xf32>
    tpu.vector_store %arg5[%c0_6, %c0_7, %c0_8], %9 {strides = array<i32>} : memref<1x8x256xf32, #tpu.memory_space<vmem>>, vector<1x8x256xf32>,
    return
  }
  func.func @transform_0(%arg0: i32, %arg1: i32) -> (i32, i32, i32) {
    %c0_i32 = arith.constant 0 : i32
    %c0_i32_0 = arith.constant 0 : i32
    return %arg0, %c0_i32, %arg1 : i32, i32, i32
  }
  func.func @transform_1(%arg0: i32, %arg1: i32) -> (i32, i32) {
    %c0_i32 = arith.constant 0 : i32
    %c0_i32_0 = arith.constant 0 : i32
    %c0_i32_1 = arith.constant 0 : i32
    return %c0_i32, %c0_i32_0 : i32, i32
  }
  func.func @transform_2(%arg0: i32, %arg1: i32) -> (i32, i32) {
    %c0_i32 = arith.constant 0 : i32
    %c0_i32_0 = arith.constant 0 : i32
    %c0_i32_1 = arith.constant 0 : i32
    return %c0_i32, %c0_i32_0 : i32, i32
  }
  func.func @transform_3(%arg0: i32, %arg1: i32) -> (i32, i32, i32) {
    %c0_i32 = arith.constant 0 : i32
    %c0_i32_0 = arith.constant 0 : i32
    return %arg0, %c0_i32, %arg1 : i32, i32, i32
  }
}

</mosaic_0001>

<llo_original>
// kernel: tpu_custom_call.1
$region0: #{tpu_custom_call.1}
  #allocation0 [shape = 'u32[]', space=smem, size = 0x4, offset = 0x4, fixed_abs, tag = 'smem constant byte address 0x4 - core index']
  #allocation1 [shape = 'u32[144,128]{1,0:T(1,128)}', space=vmem, size = 0x12000, scoped, tag = 'internal scratch']
  %s0 = inlined_call_operand.hbm [shape: f32[2,8,256], index: 0, kind: input, shape index: {}]
  %s1 = inlined_call_operand.vmem [shape: f32[8,8], index: 1, kind: input, shape index: {}]
  %s2 = inlined_call_operand.vmem [shape: f32[8,1], index: 2, kind: input, shape index: {}]
  %s3 = inlined_call_operand.hbm [shape: f32[2,8,256], index: 3, kind: output, shape index: {}]
  %s4 = sld [smem:[#allocation0]]
  $region49: #{tpu_custom_call.1} parent=0
    _
  %s6 = ssub.s32 1, %s4
  %s7 = scalar_select 0, %s6, %s4
  $region1: #{tpu_custom_call.1} parent=0
    #allocation2 [shape = 'u8[16384]{0}', space=vmem, size = 0x4000, scoped, tag = 'input window, operand 0']
    #allocation3 [shape = 's32[2]{0}', space=sflag, size = 0x8, scoped, tag = 'scoped memory for tpu_custom_call.1']
    #allocation4 [shape = 's32[2]{0}', space=sflag, size = 0x8, scoped, tag = 'scoped memory for tpu_custom_call.1']
    #allocation5 [shape = 'u8[16384]{0}', space=vmem, size = 0x4000, scoped, tag = 'output window, operand 0']
    %8 = vsyncpa [#allocation3], 0
    %s9 = scalar_lea.sflag [#allocation3], 1
    %10 = vsyncpa %s9, 0
    %11 = vsyncpa [#allocation4], 0
    %s12 = scalar_lea.sflag [#allocation4], 1
    %13 = vsyncpa %s12, 0
    loop: start=0, step=1, limit=4
    $region2: #{tpu_custom_call.1} parent=1 // loop_pre_header
      _
    $region3: #{tpu_custom_call.1} parent=1 // loop_header
      %s15 = sphi 0, %s19
      %p16 = scmp.ge.s32.totalorder %s15, 4
      %s22 = sphi 0, %s34
      %s23 = sphi 0, %s30
      %s24 = sphi 0, %s22
      %s25 = sphi 0, %s23
      %s26 = sphi 0, %s24
      %s27 = sphi 0, %s25
      %s39 = sphi 0, %s41
      %s42 = sphi 0, %s39
      %s43 = sphi 0, %s42
      %s59 = sphi 0, %s43
      %s63 = sphi 0, %s63
      %s65 = sphi 0, %s63
      %s66 = sphi 0, %s65
      %s80 = sphi 0, %s66
      %s84 = sphi 0, %s84
      %s86 = sphi 0, %s84
      %s87 = sphi 0, %s86
      %s101 = sphi 0, %s87
      %s109 = sphi 0, %s111
      %s112 = sphi 0, %s109
      %s113 = sphi 0, %s112
      %s129 = sphi 0, %s113
    $region4: #{tpu_custom_call.1} parent=1 // loop_header_branch
      %18 = sbr.rel (%p16) target = $region8
    $region5: #{tpu_custom_call.1} parent=1 // loop_body
      %s20 = ssub.s32 %s15, 1
      %s21 = ssub.s32 %s15, 2
      %s28 = sadd.s32 1, %s23
      %p29 = scmp.ge.s32.totalorder %s28, 1
      %s30 = scalar_select %p29, 0, %s28
      %s31 = sadd.s32 1, %s22
      %s32 = scalar_select %p29, %s31, %s22
      %p33 = scmp.ge.s32.totalorder %s32, 2
      %s34 = scalar_select %p33, 0, %s32
      %s35 = ssub.s32 %s22, %s34
      %s36 = ssub.s32 %s23, %s30
      %s37 = sor.u32 %s35, %s36
      %p38 = scmp.eq.s32.totalorder %s37, 0
      %s40 = sadd.s32 %s39, 1
      %s41 = scalar_select %p38, %s39, %s40
      %p44 = pneg %p38
      %p45 = scmp.eq.s32.totalorder %s15, 1
      %p46 = por %p44, %p45
      %p47 = scmp.ne.s32.totalorder %s39, %s42
      %p48 = scmp.eq.s32.totalorder %s15, 0
      %p49 = por %p47, %p48
      %p50 = scmp.ne.s32.totalorder %s39, %s42
      %p51 = scmp.eq.s32.totalorder %s20, 1
      %p52 = por %p50, %p51
      %p53 = scmp.ne.s32.totalorder %s42, %s43
      %p54 = scmp.eq.s32.totalorder %s20, 0
      %p55 = por %p53, %p54
      %p56 = scmp.ne.s32.totalorder %s42, %s43
      %p57 = scmp.eq.s32.totalorder %s21, 1
      %p58 = por %p56, %p57
      %p60 = scmp.ne.s32.totalorder %s43, %s59
      %p61 = scmp.eq.s32.totalorder %s21, 0
      %p62 = por %p60, %p61
      %s64 = sadd.s32 %s63, 1
      %p67 = scmp.eq.s32.totalorder %s15, 1
      %p68 = scmp.ne.s32.totalorder %s63, %s65
      %p69 = scmp.eq.s32.totalorder %s15, 0
      %p70 = por %p68, %p69
      %p71 = scmp.ne.s32.totalorder %s63, %s65
      %p72 = scmp.eq.s32.totalorder %s20, 1
      %p73 = por %p71, %p72
      %p74 = scmp.ne.s32.totalorder %s65, %s66
      %p75 = scmp.eq.s32.totalorder %s20, 0
      %p76 = por %p74, %p75
      %p77 = scmp.ne.s32.totalorder %s65, %s66
      %p78 = scmp.eq.s32.totalorder %s21, 1
      %p79 = por %p77, %p78
      %p81 = scmp.ne.s32.totalorder %s66, %s80
      %p82 = scmp.eq.s32.totalorder %s21, 0
      %p83 = por %p81, %p82
      %s85 = sadd.s32 %s84, 1
      %p88 = scmp.eq.s32.totalorder %s15, 1
      %p89 = scmp.ne.s32.totalorder %s84, %s86
      %p90 = scmp.eq.s32.totalorder %s15, 0
      %p91 = por %p89, %p90
      %p92 = scmp.ne.s32.totalorder %s84, %s86
      %p93 = scmp.eq.s32.totalorder %s20, 1
      %p94 = por %p92, %p93
      %p95 = scmp.ne.s32.totalorder %s86, %s87
      %p96 = scmp.eq.s32.totalorder %s20, 0
      %p97 = por %p95, %p96
      %p98 = scmp.ne.s32.totalorder %s86, %s87
      %p99 = scmp.eq.s32.totalorder %s21, 1
      %p100 = por %p98, %p99
      %p102 = scmp.ne.s32.totalorder %s87, %s101
      %p103 = scmp.eq.s32.totalorder %s21, 0
      %p104 = por %p102, %p103
      %s105 = ssub.s32 %s22, %s34
      %s106 = ssub.s32 %s23, %s30
      %s107 = sor.u32 %s105, %s106
      %p108 = scmp.eq.s32.totalorder %s107, 0
      %s110 = sadd.s32 %s109, 1
      %s111 = scalar_select %p108, %s109, %s110
      %p114 = pneg %p108
      %p115 = scmp.eq.s32.totalorder %s15, 1
      %p116 = por %p114, %p115
      %p117 = scmp.ne.s32.totalorder %s109, %s112
      %p118 = scmp.eq.s32.totalorder %s15, 0
      %p119 = por %p117, %p118
      %p120 = scmp.ne.s32.totalorder %s109, %s112
      %p121 = scmp.eq.s32.totalorder %s20, 1
      %p122 = por %p120, %p121
      %p123 = scmp.ne.s32.totalorder %s112, %s113
      %p124 = scmp.eq.s32.totalorder %s20, 0
      %p125 = por %p123, %p124
      %p126 = scmp.ne.s32.totalorder %s112, %s113
      %p127 = scmp.eq.s32.totalorder %s21, 1
      %p128 = por %p126, %p127
      %p130 = scmp.ne.s32.totalorder %s113, %s129
      %p131 = scmp.eq.s32.totalorder %s21, 0
      %p132 = por %p130, %p131
      %p133 = scmp.le.s32.totalorder 1, %s15
      %p134 = scmp.lt.s32.totalorder %s15, 3
      %p135 = pnand %p133, %p134
      %p136 = pneg %p135
      // Predicated region
      $region9: #{tpu_custom_call.1} parent=5 // pred_check
        _
      $region10: #{tpu_custom_call.1} parent=5 // pred_check_branch
        %138 = sbr.rel (%p135) target = $region12
      $region11: #{tpu_custom_call.1} parent=5 // pred_region
        %s139 = ssub.s32 %s15, 1
        // Predicated region
        $region13: #{tpu_custom_call.1} parent=11 // pred_check
          %p140 = pneg %p76
        $region14: #{tpu_custom_call.1} parent=11 // pred_check_branch
          %142 = sbr.rel (%p140) target = $region16
        $region15: #{tpu_custom_call.1} parent=11 // pred_region
          _
        $region16: #{tpu_custom_call.1} parent=11 // pred_fallthru
          _
        // Predicated region
        $region17: #{tpu_custom_call.1} parent=11 // pred_check
          %p143 = pneg %p97
        $region18: #{tpu_custom_call.1} parent=11 // pred_check_branch
          %145 = sbr.rel (%p143) target = $region20
        $region19: #{tpu_custom_call.1} parent=11 // pred_region
          _
        $region20: #{tpu_custom_call.1} parent=11 // pred_fallthru
          _
      $region12: #{tpu_custom_call.1} parent=5 // pred_fallthru
        _
      %p146 = scmp.lt.s32.totalorder %s15, 2
      // Predicated region
      $region21: #{tpu_custom_call.1} parent=5 // pred_check
        %p147 = pneg %p146
      $region22: #{tpu_custom_call.1} parent=5 // pred_check_branch
        %149 = sbr.rel (%p147) target = $region24
      $region23: #{tpu_custom_call.1} parent=5 // pred_region
        // Predicated region
        $region25: #{tpu_custom_call.1} parent=23 // pred_check
          %p150 = pneg %p49
        $region26: #{tpu_custom_call.1} parent=23 // pred_check_branch
          %152 = sbr.rel (%p150) target = $region28
        $region27: #{tpu_custom_call.1} parent=23 // pred_region
          %s153 = sand.u32 %s39, 1
          %s154 = scalar_lea.sflag [#allocation3], %s153
          %s155 = sand.u32 %s39, 1
          %s156 = smul.addr %s155, 16
          %s157 = scalar_lea.vmem [#allocation2], %s156
          %s158 = smul.u32 2, %s23
          %s160 = ssub.s32 256, 256
          %161 = vsyncadd %s154, %s160
          %s162 = smul.addr %s22, 2
          %s163 = sadd.s32 %s158, %s162
          %s164 = smul.addr %s163, 128
          %s165 = scalar_lea.hbm %s0, %s164
          %s167 = sshll.u32 %s157, 4
          %s168 = int_to_ptr.vmem [resolvable:$true] %s167
          %170 = dma.hbm_to_vmem [thread:$0]  %s165, 256, %s168, %s154
        $region28: #{tpu_custom_call.1} parent=23 // pred_fallthru
          _
      $region24: #{tpu_custom_call.1} parent=5 // pred_fallthru
        _
      %p171 = scmp.le.s32.totalorder 1, %s15
      %p172 = scmp.lt.s32.totalorder %s15, 3
      %p173 = pnand %p171, %p172
      %p174 = pneg %p173
      // Predicated region
      $region29: #{tpu_custom_call.1} parent=5 // pred_check
        _
      $region30: #{tpu_custom_call.1} parent=5 // pred_check_branch
        %176 = sbr.rel (%p173) target = $region32
      $region31: #{tpu_custom_call.1} parent=5 // pred_region
        %s177 = ssub.s32 %s15, 1
        %s178 = sand.u32 %s42, 1
        %s179 = scalar_lea.sflag [#allocation3], %s178
        %s180 = sand.u32 %s42, 1
        %s181 = smul.addr %s180, 16
        %s182 = scalar_lea.vmem [#allocation2], %s181
        // Predicated region
        $region33: #{tpu_custom_call.1} parent=31 // pred_check
          %p183 = pneg %p55
        $region34: #{tpu_custom_call.1} parent=31 // pred_check_branch
          %185 = sbr.rel (%p183) target = $region36
        $region35: #{tpu_custom_call.1} parent=31 // pred_region
          %186 = dma.done %s179, 256
        $region36: #{tpu_custom_call.1} parent=31 // pred_fallthru
          _
        %s187 = sand.u32 %s42, 1
        %s188 = scalar_lea.sflag [#allocation3], %s187
        %s189 = sand.u32 %s42, 1
        %s190 = smul.addr %s189, 16
        %s191 = scalar_lea.vmem [#allocation2], %s190
        %p192 = pneg %p55
        %p193 = pneg %p52
        %p194 = pneg %p76
        %p195 = pneg %p73
        %p196 = pneg %p97
        %p197 = pneg %p94
        %p198 = pneg %p125
        %p199 = pneg %p122
        %s200 = sand.u32 %s112, 1
        %s201 = scalar_lea.sflag [#allocation4], %s200
        %s202 = sand.u32 %s112, 1
        %s203 = smul.addr %s202, 16
        %s204 = scalar_lea.vmem [#allocation5], %s203
        %s205 = smul.u32 2, %s25
        %s206 = smul.u32 2, %s25
        %v207 = vld [vmem:[%s1] sm:$0xff]
        %v208 = vld [vmem:[%s182] sm:$0xff]
        %v209 = vld [vmem:[%s182 + $0x8] sm:$0xff]
        %v210 = vld [vmem:[%s2] sm:$0xff]
        %212 = vset.pattern.permute.xlu0 0
        %213 = vperm.xlu0 %212, %v210
        %v214 = vpop.permute.xlu0 %213
        %vm216 = vcmask 64512
        %v218 = vsel %vm216, %v207, 0
        %220 = vmatprep.subr.mxu0 0.0
        %221 = vmatpush1.msra.mxu0 0.0
        %222 = vmatprep.subr.mxu0 0.0
        %223 = vmatpush1.msra.mxu0 0.0
        %224 = vmatprep.subr.mxu0 0.0
        %225 = vmatpush1.msra.mxu0 0.0
        %226 = vmatprep.subr.mxu0 0.0
        %227 = vmatpush1.msra.mxu0 0.0
        %228 = vmatprep.subr.mxu0 0.0
        %229 = vmatpush1.msra.mxu0 0.0
        %230 = vmatprep.subr.mxu0 0.0
        %231 = vmatpush1.msra.mxu0 0.0
        %232 = vmatprep.subr.mxu0 0.0
        %233 = vmatpush1.msra.mxu0 0.0
        %234 = vmatprep.subr.mxu0 0.0
        %235 = vmatpush1.msra.mxu0 0.0
        %236 = vmatprep.subr.mxu0 0.0
        %237 = vmatpush1.msra.mxu0 0.0
        %238 = vmatprep.subr.mxu0 0.0
        %239 = vmatpush1.msra.mxu0 0.0
        %240 = vmatprep.subr.mxu0 0.0
        %241 = vmatpush1.msra.mxu0 0.0
        %242 = vmatprep.subr.mxu0 0.0
        %243 = vmatpush1.msra.mxu0 0.0
        %244 = vmatprep.subr.mxu0 0.0
        %245 = vmatpush1.msra.mxu0 0.0
        %246 = vmatprep.subr.mxu0 0.0
        %247 = vmatpush1.msra.mxu0 0.0
        %248 = vmatprep.subr.mxu0 0.0
        %249 = vmatpush1.msra.mxu0 0.0
        %250 = vmatprep.subr.mxu0 %v209
        %251 = vmatpush1.msra.mxu0 %v208
        %252 = vmatprep.subr.mxu0 0.0
        %253 = vmatpush2.msra.mxu0 0.0
        %254 = vmatprep.subr.mxu0 0.0
        %255 = vmatpush2.msra.mxu0 0.0
        %256 = vmatprep.subr.mxu0 0.0
        %257 = vmatpush2.msra.mxu0 0.0
        %258 = vmatprep.subr.mxu0 0.0
        %259 = vmatpush2.msra.mxu0 0.0
        %260 = vmatprep.subr.mxu0 0.0
        %261 = vmatpush2.msra.mxu0 0.0
        %262 = vmatprep.subr.mxu0 0.0
        %263 = vmatpush2.msra.mxu0 0.0
        %264 = vmatprep.subr.mxu0 0.0
        %265 = vmatpush2.msra.mxu0 0.0
        %266 = vmatprep.subr.mxu0 0.0
        %267 = vmatpush2.msra.mxu0 0.0
        %268 = vmatprep.subr.mxu0 0.0
        %269 = vmatpush2.msra.mxu0 0.0
        %270 = vmatprep.subr.mxu0 0.0
        %271 = vmatpush2.msra.mxu0 0.0
        %272 = vmatprep.subr.mxu0 0.0
        %273 = vmatpush2.msra.mxu0 0.0
        %274 = vmatprep.subr.mxu0 0.0
        %275 = vmatpush2.msra.mxu0 0.0
        %276 = vmatprep.subr.mxu0 0.0
        %277 = vmatpush2.msra.mxu0 0.0
        %278 = vmatprep.subr.mxu0 0.0
        %279 = vmatpush2.msra.mxu0 0.0
        %280 = vmatprep.subr.mxu0 0.0
        %281 = vmatpush2.msra.mxu0 0.0
        %282 = vmatprep.subr.mxu0 0.0
        %283 = vmatpush2.msra.mxu0 0.0
        %284 = vmatprep.mubr.f32.mxu0 0.0
        %285 = vmatmul.mubr.f32.gmra.mxu0 %v218
        %v286 = vpop.f32.mrf.mxu0
        %v287 = vadd.f32 %v214, %v286
        %v288 = vpop.f32.mrf.mxu0
        %v289 = vadd.f32 %v214, %v288
        %290 = vdwg.mxu0
        %291 = vst [vmem:[%s204] sm:$0xff] %v287
        %292 = vst [vmem:[%s204 + $0x8] sm:$0xff] %v289
        %s293 = sand.u32 %s112, 1
        %s294 = scalar_lea.sflag [#allocation4], %s293
        %s295 = sand.u32 %s112, 1
        %s296 = smul.addr %s295, 16
        %s297 = scalar_lea.vmem [#allocation5], %s296
        // Predicated region
        $region37: #{tpu_custom_call.1} parent=31 // pred_check
          %p298 = pneg %p122
        $region38: #{tpu_custom_call.1} parent=31 // pred_check_branch
          %300 = sbr.rel (%p298) target = $region40
        $region39: #{tpu_custom_call.1} parent=31 // pred_region
          %s301 = smul.u32 2, %s25
          %s303 = ssub.s32 256, 256
          %304 = vsyncadd %s294, %s303
          %s305 = smul.addr %s24, 2
          %s306 = sadd.s32 %s301, %s305
          %s307 = smul.addr %s306, 128
          %s308 = scalar_lea.hbm %s3, %s307
          %s310 = sshll.u32 %s297, 4
          %s311 = int_to_ptr.vmem [resolvable:$true] %s310
          %313 = dma.vmem_to_hbm [thread:$0]  %s311, 256, %s308, %s294
        $region40: #{tpu_custom_call.1} parent=31 // pred_fallthru
          _
      $region32: #{tpu_custom_call.1} parent=5 // pred_fallthru
        _
      %p314 = scmp.le.s32.totalorder 2, %s15
      // Predicated region
      $region41: #{tpu_custom_call.1} parent=5 // pred_check
        %p315 = pneg %p314
      $region42: #{tpu_custom_call.1} parent=5 // pred_check_branch
        %317 = sbr.rel (%p315) target = $region44
      $region43: #{tpu_custom_call.1} parent=5 // pred_region
        %s318 = ssub.s32 %s15, 2
        // Predicated region
        $region45: #{tpu_custom_call.1} parent=43 // pred_check
          %p319 = pneg %p128
        $region46: #{tpu_custom_call.1} parent=43 // pred_check_branch
          %321 = sbr.rel (%p319) target = $region48
        $region47: #{tpu_custom_call.1} parent=43 // pred_region
          %s322 = sand.u32 %s113, 1
          %s323 = scalar_lea.sflag [#allocation4], %s322
          %s324 = sand.u32 %s113, 1
          %s325 = smul.addr %s324, 16
          %s326 = scalar_lea.vmem [#allocation5], %s325
          %327 = dma.done %s323, 256
        $region48: #{tpu_custom_call.1} parent=43 // pred_fallthru
          _
      $region44: #{tpu_custom_call.1} parent=5 // pred_fallthru
        _
    $region6: #{tpu_custom_call.1} parent=1 // loop_footer
      %s19 = sadd.s32 1, %s15
    $region7: #{tpu_custom_call.1} parent=1 // loop_footer_branch
      %14 = sbr.rel target = $region3
    $region8: #{tpu_custom_call.1} parent=1 // loop_exit
      _
    %328 = vsyncpa [#allocation3], 1
    %s329 = scalar_lea.sflag [#allocation3], 1
    %330 = vsyncpa %s329, 1
    %331 = vsyncpa [#allocation4], 1
    %s332 = scalar_lea.sflag [#allocation4], 1
    %333 = vsyncpa %s332, 1

</llo_original>
